<compile_context>
chip_gen: v6e
topology: v6e:2x2x1
jax: 0.10.0
libtpu: 0.0.40
codegen_flags: <defaults>
</compile_context>

<pallas_src>
import jax
import jax.numpy as jnp
from jax.experimental import pallas as pl
from jax.experimental.pallas import tpu as pltpu


# ----------------------------------------------------------------------------
# helpers
# ----------------------------------------------------------------------------
def _cdiv(a, b):
    return (a + b - 1) // b


def _round_up(x, m):
    return ((x + m - 1) // m) * m


def _pad_last2(a, d1, d2):
    p1, p2 = d1 - a.shape[-2], d2 - a.shape[-1]
    if p1 == 0 and p2 == 0:
        return a
    return jnp.pad(a, ((0, 0), (0, p1), (0, p2)))


def _pick_tiles(P, K, C):
    """Adaptive MXU/lane friendly tiles with minimal zero padding."""
    n_p = _cdiv(P, 512)
    tP = _round_up(_cdiv(P, n_p), 8)
    n_k = _cdiv(K, 512)
    tK = _round_up(_cdiv(K, n_k), 128)
    n_c = _cdiv(C, 256)
    tC = _round_up(_cdiv(C, n_c), 128)
    return tP, n_p * tP, tK, n_k * tK, tC, n_c * tC


# ----------------------------------------------------------------------------
# Pallas kernel: tiled per-sample dynamic conv (matmul) + fused BN/residual/ReLU
# ----------------------------------------------------------------------------
def fused_dynconv_bn(patches, weights, scale, shift, residual=None,
                     apply_relu=True, out_dtype=jnp.float32):
    """patches: (N, P, K), weights: (N, K, C), scale: (N, C) per-sample folded
    (filter-attention * BN gamma/std), shift: (C,), residual: (N, P, C) or None.
    Returns (N, P, C) in out_dtype."""
    N, P, K = patches.shape
    C = weights.shape[-1]
    has_residual = residual is not None

    tP, Pp, tK, Kp, tC, Cp = _pick_tiles(P, K, C)
    single_k = (Kp == tK)

    patches_p = _pad_last2(patches, Pp, Kp).astype(jnp.bfloat16)
    weights_p = _pad_last2(weights, Kp, Cp).astype(jnp.bfloat16)
    scale_p = jnp.pad(scale.astype(jnp.float32), ((0, 0), (0, Cp - C))).reshape(N, 1, Cp)
    shift_p = jnp.pad(shift.astype(jnp.float32), (0, Cp - C)).reshape(1, Cp)

    args = [patches_p, weights_p, scale_p, shift_p]
    if has_residual:
        args.append(_pad_last2(residual.astype(jnp.float32), Pp, Cp))

    def _epilogue(acc, sc_ref, sh_ref, r_ref, o_ref):
        y = acc * sc_ref[0] + sh_ref[...]          # filter-attn folded into scale
        if has_residual:
            y = y + r_ref[0]
        if apply_relu:
            y = jnp.maximum(y, 0.0)
        o_ref[0] = y.astype(o_ref.dtype)

    if single_k:
        # Whole contraction in one tile: no scratch, no K grid axis, no pl.when.
        def kernel(*refs):
            if has_residual:
                p_ref, w_ref, sc_ref, sh_ref, r_ref, o_ref = refs
            else:
                p_ref, w_ref, sc_ref, sh_ref, o_ref = refs
                r_ref = None
            acc = jnp.dot(p_ref[0], w_ref[0], preferred_element_type=jnp.float32)
            _epilogue(acc, sc_ref, sh_ref, r_ref, o_ref)

        grid = (N, Pp // tP, Cp // tC)
        in_specs = [
            pl.BlockSpec((1, tP, tK), lambda n, p, c: (n, p, 0)),
            pl.BlockSpec((1, tK, tC), lambda n, p, c: (n, 0, c)),
            pl.BlockSpec((1, 1, tC), lambda n, p, c: (n, 0, c)),
            pl.BlockSpec((1, tC), lambda n, p, c: (0, c)),
        ]
        if has_residual:
            in_specs.append(pl.BlockSpec((1, tP, tC), lambda n, p, c: (n, p, c)))
        out_specs = pl.BlockSpec((1, tP, tC), lambda n, p, c: (n, p, c))
        scratch_shapes = []
        dim_sem = ("parallel", "parallel", "parallel")
    else:
        def kernel(*refs):
            if has_residual:
                p_ref, w_ref, sc_ref, sh_ref, r_ref, o_ref, acc_ref = refs
            else:
                p_ref, w_ref, sc_ref, sh_ref, o_ref, acc_ref = refs
                r_ref = None
            kk = pl.program_id(3)

            @pl.when(kk == 0)
            def _init():
                acc_ref[...] = jnp.zeros_like(acc_ref)

            acc_ref[...] += jnp.dot(p_ref[0], w_ref[0],
                                    preferred_element_type=jnp.float32)

            @pl.when(kk == pl.num_programs(3) - 1)
            def _fin():
                _epilogue(acc_ref[...], sc_ref, sh_ref, r_ref, o_ref)

        grid = (N, Pp // tP, Cp // tC, Kp // tK)
        in_specs = [
            pl.BlockSpec((1, tP, tK), lambda n, p, c, k: (n, p, k)),
            pl.BlockSpec((1, tK, tC), lambda n, p, c, k: (n, k, c)),
            pl.BlockSpec((1, 1, tC), lambda n, p, c, k: (n, 0, c)),
            pl.BlockSpec((1, tC), lambda n, p, c, k: (0, c)),
        ]
        if has_residual:
            in_specs.append(pl.BlockSpec((1, tP, tC), lambda n, p, c, k: (n, p, c)))
        out_specs = pl.BlockSpec((1, tP, tC), lambda n, p, c, k: (n, p, c))
        scratch_shapes = [pltpu.VMEM((tP, tC), jnp.float32)]
        dim_sem = ("parallel", "parallel", "parallel", "arbitrary")

    flops = 2 * N * Pp * Kp * Cp
    bytes_accessed = (N * Pp * Kp * 2 * (Cp // tC)
                      + N * Kp * Cp * 2 * (Pp // tP)
                      + N * Pp * Cp * 4 * (1 + int(has_residual)))

    out = pl.pallas_call(
        kernel,
        grid_spec=pltpu.PrefetchScalarGridSpec(
            num_scalar_prefetch=0,
            grid=grid,
            in_specs=in_specs,
            out_specs=out_specs,
            scratch_shapes=scratch_shapes,
        ),
        out_shape=jax.ShapeDtypeStruct((N, Pp, Cp), out_dtype),
        compiler_params=pltpu.CompilerParams(dimension_semantics=dim_sem),
        cost_estimate=pl.CostEstimate(flops=int(flops), transcendentals=0,
                                      bytes_accessed=int(bytes_accessed)),
    )(*args)
    return out[:, :P, :C]


def dynconv_bn_ref(patches, weights, scale, shift, residual=None, apply_relu=True):
    """Pure-JAX f32 reference for the fused kernel (used for a smoke check)."""
    y = jnp.einsum('npk,nkc->npc', patches, weights) * scale[:, None, :] + shift[None, None, :]
    if residual is not None:
        y = y + residual
    return jnp.maximum(y, 0.0) if apply_relu else y


# ----------------------------------------------------------------------------
# plain-JAX glue: channel-last im2col, ODConv attention, expert-weight aggregation
# ----------------------------------------------------------------------------
def im2col_cl(x_cl, H, W, k, stride, dilation):
    """x_cl: (N, H*W, C) channel-last -> (N, Hout*Wout, k*k*C), K ordered (kh, kw, C)."""
    N, _, C = x_cl.shape
    if k == 1 and stride == 1:
        return x_cl, H, W
    x4 = x_cl.reshape(N, H, W, C)
    pad = dilation * (k - 1) // 2
    xp = jnp.pad(x4, ((0, 0), (pad, pad), (pad, pad), (0, 0)))
    Hout = (H + 2 * pad - dilation * (k - 1) - 1) // stride + 1
    Wout = (W + 2 * pad - dilation * (k - 1) - 1) // stride + 1
    taps = []
    for i in range(k):
        for j in range(k):
            taps.append(xp[:, i * dilation: i * dilation + stride * (Hout - 1) + 1: stride,
                              j * dilation: j * dilation + stride * (Wout - 1) + 1: stride, :])
    col = jnp.stack(taps, axis=3)                       # (N, Hout, Wout, k*k, C)
    return col.reshape(N, Hout * Wout, k * k * C), Hout, Wout


def od_attention(x_cl, ap):
    """ODConv attention head: GAP -> FC -> BN -> ReLU -> 4 attention branches."""
    N = x_cl.shape[0]
    k, E = ap['k'], ap['E']
    gap = x_cl.mean(axis=1)                              # (N, Cin)  channel-last GAP
    h = gap @ ap['w_fc']
    h = h * ap['bn_scale'] + ap['bn_shift']
    h = jnp.maximum(h, 0.0)
    ch = jax.nn.sigmoid(h @ ap['w_ch'] + ap['b_ch'])     # (N, Cin)
    fil = jax.nn.sigmoid(h @ ap['w_fil'] + ap['b_fil'])  # (N, Cout)
    sp = (jax.nn.sigmoid(h @ ap['w_sp'] + ap['b_sp'])
          if k > 1 else jnp.ones((N, k * k), jnp.float32))
    ker = (jax.nn.softmax(h @ ap['w_ker'] + ap['b_ker'], axis=-1)
           if E > 1 else jnp.ones((N, E), jnp.float32))
    return ch, fil, sp, ker


def aggregate_weight(base_w, ch, sp, ker):
    """base_w: (E, Cout, Cin, k, k) -> per-sample weight (N, k*k*Cin, Cout)
    with K ordered (kh, kw, Cin) to match channel-last im2col patches."""
    E, Cout, Cin, kh, kw = base_w.shape
    N = ch.shape[0]
    # Expert mixing as one MXU matmul -- no (N, E, Cout, Cin, k, k) broadcast.
    w = (ker @ base_w.reshape(E, Cout * Cin * kh * kw)).reshape(N, Cout, Cin, kh, kw)
    w = w * sp.reshape(N, 1, 1, kh, kw) * ch.reshape(N, 1, Cin, 1, 1)
    return w.transpose(0, 3, 4, 2, 1).reshape(N, kh * kw * Cin, Cout)


def odconv_bn_act(x_cl, H, W, p, stride, dilation, bn_scale, bn_shift,
                  residual=None, apply_relu=True, use_pallas=True):
    """One ODConv + eval-mode BN (+ residual) + ReLU on channel-last activations."""
    k = p['attn']['k']
    ch, fil, sp, ker = od_attention(x_cl, p['attn'])
    wn = aggregate_weight(p['base_w'], ch, sp, ker)      # (N, K, Cout)
    patches, Ho, Wo = im2col_cl(x_cl, H, W, k, stride, dilation)
    # TODO(synk): the 3x3 path still materializes the 9x im2col patches in HBM; a fully
    # fused in-kernel tap loop (shifted-window DMA) would cut that input traffic ~9x.
    scale = fil * bn_scale[None, :]                      # fold filter attention into BN scale
    if use_pallas:
        y = fused_dynconv_bn(patches, wn, scale, bn_shift,
                             residual=residual, apply_relu=apply_relu)
    else:
        y = dynconv_bn_ref(patches, wn, scale, bn_shift,
                           residual=residual, apply_relu=apply_relu)
    return y, Ho, Wo


# ----------------------------------------------------------------------------
# deterministic parameter init (shapes follow the module's __init__)
# ----------------------------------------------------------------------------
def init_attention_params(key, cin, cout, k, E, reduction, hidden):
    A = max(int(cin * reduction), hidden)
    ks = jax.random.split(key, 11)
    s = 0.2
    p = {
        'k': k, 'E': E,
        'w_fc': s * jax.random.normal(ks[0], (cin, A), jnp.float32),
        'bn_scale': 1.0 + 0.1 * jax.random.normal(ks[1], (A,), jnp.float32),
        'bn_shift': 0.1 * jax.random.normal(ks[2], (A,), jnp.float32),
        'w_ch': s * jax.random.normal(ks[3], (A, cin), jnp.float32),
        'b_ch': 0.1 * jax.random.normal(ks[4], (cin,), jnp.float32),
        'w_fil': s * jax.random.normal(ks[5], (A, cout), jnp.float32),
        'b_fil': 0.1 * jax.random.normal(ks[6], (cout,), jnp.float32),
    }
    if k > 1:
        p['w_sp'] = s * jax.random.normal(ks[7], (A, k * k), jnp.float32)
        p['b_sp'] = 0.1 * jax.random.normal(ks[8], (k * k,), jnp.float32)
    if E > 1:
        p['w_ker'] = s * jax.random.normal(ks[9], (A, E), jnp.float32)
        p['b_ker'] = 0.1 * jax.random.normal(ks[10], (E,), jnp.float32)
    return p


def init_odconv_params(key, cin, cout, k, E, reduction, hidden):
    k_attn, k_w = jax.random.split(key)
    return {
        'attn': init_attention_params(k_attn, cin, cout, k, E, reduction, hidden),
        'base_w': 0.2 * jax.random.normal(k_w, (E, cout, cin, k, k), jnp.float32),
    }


def init_bn(key, c):
    k1, k2 = jax.random.split(key)
    return {'scale': 1.0 + 0.1 * jax.random.normal(k1, (c,), jnp.float32),
            'shift': 0.1 * jax.random.normal(k2, (c,), jnp.float32)}


def init_bottleneck_params(key, in_chans, out_chans, groups=1, width_per_group=64,
                           base_width=64, expert_num=4, reduction=0.0625,
                           hidden_chans=16, expansion=4):
    width = int(out_chans * (width_per_group / base_width) * groups)
    cout3 = out_chans * expansion
    ks = jax.random.split(key, 6)
    return {
        'width': width, 'cout3': cout3,
        'c1': init_odconv_params(ks[0], in_chans, width, 1, expert_num, reduction, hidden_chans),
        'bn1': init_bn(ks[1], width),
        'c2': init_odconv_params(ks[2], width, width, 3, expert_num, reduction, hidden_chans),
        'bn2': init_bn(ks[3], width),
        'c3': init_odconv_params(ks[4], width, cout3, 1, expert_num, reduction, hidden_chans),
        'bn3': init_bn(ks[5], cout3),
    }


# ----------------------------------------------------------------------------
# Bottleneck forward (down_sample=None path: requires in_chans == out_chans*4, stride=1)
# ----------------------------------------------------------------------------
def bottleneck_forward(x, params, stride=1, dilation=1, use_pallas=True):
    N, C, H, W = x.shape
    # single NCHW -> channel-last (N, HW, C) layout change for the whole block
    x_cl = x.reshape(N, C, H * W).transpose(0, 2, 1)
    identity = x_cl
    y, H1, W1 = odconv_bn_act(x_cl, H, W, params['c1'], 1, dilation,
                              params['bn1']['scale'], params['bn1']['shift'],
                              apply_relu=True, use_pallas=use_pallas)
    y, H2, W2 = odconv_bn_act(y, H1, W1, params['c2'], stride, dilation,
                              params['bn2']['scale'], params['bn2']['shift'],
                              apply_relu=True, use_pallas=use_pallas)
    y, H3, W3 = odconv_bn_act(y, H2, W2, params['c3'], 1, dilation,
                              params['bn3']['scale'], params['bn3']['shift'],
                              residual=identity, apply_relu=True, use_pallas=use_pallas)
    Cout3 = y.shape[-1]
    # single channel-last -> NCHW layout change at exit
    return y.transpose(0, 2, 1).reshape(N, Cout3, H3, W3)


if __name__ == "__main__":
    key = jax.random.PRNGKey(0)
    k_x, k_p = jax.random.split(key)
    in_chans, out_chans = 16, 4          # in_chans == out_chans * expansion -> valid residual
    N, H, W = 2, 8, 8
    x = jax.random.normal(k_x, (N, in_chans, H, W), jnp.float32)
    params = init_bottleneck_params(k_p, in_chans, out_chans)

    fwd = jax.jit(lambda xx: bottleneck_forward(xx, params))
    out = fwd(x)
    jax.block_until_ready(out)
    assert out.shape == (N, out_chans * 4, H, W), out.shape
    assert bool(jnp.all(jnp.isfinite(out)))

    # loose smoke check vs pure-JAX f32 reference (kernel uses bf16 matmul inputs)
    ref = bottleneck_forward(x, params, use_pallas=False)
    err = float(jnp.max(jnp.abs(out - ref)) / (1.0 + float(jnp.max(jnp.abs(ref)))))
    assert err < 0.1, err

    print("KERNEL_OK")
</pallas_src>

<mosaic_0001>
module attributes {stable_mosaic.version = 11 : i64} {
  func.func @kernel(%arg0: i32, %arg1: i32, %arg2: i32, %arg3: memref<1x64x128xbf16, #tpu.memory_space<vmem>>, %arg4: memref<1x128x128xbf16, #tpu.memory_space<vmem>>, %arg5: memref<1x1x128xf32, #tpu.memory_space<vmem>>, %arg6: memref<1x128xf32, #tpu.memory_space<vmem>>, %arg7: memref<1x64x128xf32, #tpu.memory_space<vmem>>) attributes {dimension_semantics = [#tpu.dimension_semantics<parallel>, #tpu.dimension_semantics<parallel>, #tpu.dimension_semantics<parallel>], iteration_bounds = array<i64: 2, 1, 1>, scalar_prefetch = 0 : i64, scratch_operands = 0 : i64, tpu.core_type = #tpu.core_type<tc>, window_params = [{transform_indices = @transform_0, window_bounds = array<i64: 1, 64, 128>}, {transform_indices = @transform_1, window_bounds = array<i64: 1, 128, 128>}, {transform_indices = @transform_2, window_bounds = array<i64: 1, 1, 128>}, {transform_indices = @transform_3, window_bounds = array<i64: 1, 128>}, {transform_indices = @transform_4, window_bounds = array<i64: 1, 64, 128>}]} {
    %c0 = arith.constant 0 : index
    %c0_0 = arith.constant 0 : index
    %c0_1 = arith.constant 0 : index
    %0 = vector.load %arg3[%c0, %c0_0, %c0_1] : memref<1x64x128xbf16, #tpu.memory_space<vmem>>, vector<1x64x128xbf16>
    %1 = vector.shape_cast %0 : vector<1x64x128xbf16> to vector<64x128xbf16>
    %c0_2 = arith.constant 0 : index
    %c0_3 = arith.constant 0 : index
    %c0_4 = arith.constant 0 : index
    %2 = vector.load %arg4[%c0_2, %c0_3, %c0_4] : memref<1x128x128xbf16, #tpu.memory_space<vmem>>, vector<1x128x128xbf16>
    %3 = vector.shape_cast %2 : vector<1x128x128xbf16> to vector<128x128xbf16>
    %cst = arith.constant dense<0.000000e+00> : vector<64x128xf32>
    %4 = tpu.matmul %1, %3, %cst {dimension_numbers = #tpu.dot_dimension_numbers<[1], [0], [0], [1], [0, 0, 1, 1], [], []>} : vector<64x128xbf16>, vector<128x128xbf16>, vector<64x128xf32> -> vector<64x128xf32>
    %c0_5 = arith.constant 0 : index
    %c0_6 = arith.constant 0 : index
    %c0_7 = arith.constant 0 : index
    %5 = vector.load %arg5[%c0_5, %c0_6, %c0_7] : memref<1x1x128xf32, #tpu.memory_space<vmem>>, vector<1x1x128xf32>
    %6 = vector.shape_cast %5 : vector<1x1x128xf32> to vector<1x128xf32>
    %7 = vector.broadcast %6 : vector<1x128xf32> to vector<64x128xf32>
    %8 = arith.mulf %4, %7 : vector<64x128xf32>
    %c0_8 = arith.constant 0 : index
    %c0_9 = arith.constant 0 : index
    %9 = vector.load %arg6[%c0_8, %c0_9] : memref<1x128xf32, #tpu.memory_space<vmem>>, vector<1x128xf32>
    %10 = vector.broadcast %9 : vector<1x128xf32> to vector<64x128xf32>
    %11 = arith.addf %8, %10 : vector<64x128xf32>
    %cst_10 = arith.constant 0.000000e+00 : f32
    %12 = vector.broadcast %cst_10 : f32 to vector<64x128xf32>
    %13 = arith.maximumf %11, %12 : vector<64x128xf32>
    %c0_11 = arith.constant 0 : index
    %c0_12 = arith.constant 0 : index
    %c0_13 = arith.constant 0 : index
    %14 = vector.load %arg7[%c0_11, %c0_12, %c0_13] : memref<1x64x128xf32, #tpu.memory_space<vmem>>, vector<1x64x128xf32>
    %15 = vector.shape_cast %14 : vector<1x64x128xf32> to vector<64x128xf32>
    %16 = vector.shape_cast %13 : vector<64x128xf32> to vector<1x64x128xf32>
    tpu.vector_store %arg7[%c0_11, %c0_12, %c0_13], %16 {strides = array<i32>} : memref<1x64x128xf32, #tpu.memory_space<vmem>>, vector<1x64x128xf32>,
    return
  }
  func.func @transform_0(%arg0: i32, %arg1: i32, %arg2: i32) -> (i32, i32, i32) {
    %c0_i32 = arith.constant 0 : i32
    %c0_i32_0 = arith.constant 0 : i32
    return %arg0, %arg1, %c0_i32 : i32, i32, i32
  }
  func.func @transform_1(%arg0: i32, %arg1: i32, %arg2: i32) -> (i32, i32, i32) {
    %c0_i32 = arith.constant 0 : i32
    %c0_i32_0 = arith.constant 0 : i32
    return %arg0, %c0_i32, %arg2 : i32, i32, i32
  }
  func.func @transform_2(%arg0: i32, %arg1: i32, %arg2: i32) -> (i32, i32, i32) {
    %c0_i32 = arith.constant 0 : i32
    %c0_i32_0 = arith.constant 0 : i32
    return %arg0, %c0_i32, %arg2 : i32, i32, i32
  }
  func.func @transform_3(%arg0: i32, %arg1: i32, %arg2: i32) -> (i32, i32) {
    %c0_i32 = arith.constant 0 : i32
    %c0_i32_0 = arith.constant 0 : i32
    return %c0_i32, %arg2 : i32, i32
  }
  func.func @transform_4(%arg0: i32, %arg1: i32, %arg2: i32) -> (i32, i32, i32) {
    %c0_i32 = arith.constant 0 : i32
    return %arg0, %arg1, %arg2 : i32, i32, i32
  }
}

module attributes {stable_mosaic.version = 11 : i64} {
  func.func @kernel(%arg0: i32, %arg1: i32, %arg2: i32, %arg3: memref<1x64x128xbf16, #tpu.memory_space<vmem>>, %arg4: memref<1x128x128xbf16, #tpu.memory_space<vmem>>, %arg5: memref<1x1x128xf32, #tpu.memory_space<vmem>>, %arg6: memref<1x128xf32, #tpu.memory_space<vmem>>, %arg7: memref<1x64x128xf32, #tpu.memory_space<vmem>>, %arg8: memref<1x64x128xf32, #tpu.memory_space<vmem>>) attributes {dimension_semantics = [#tpu.dimension_semantics<parallel>, #tpu.dimension_semantics<parallel>, #tpu.dimension_semantics<parallel>], iteration_bounds = array<i64: 2, 1, 1>, scalar_prefetch = 0 : i64, scratch_operands = 0 : i64, tpu.core_type = #tpu.core_type<tc>, window_params = [{transform_indices = @transform_0, window_bounds = array<i64: 1, 64, 128>}, {transform_indices = @transform_1, window_bounds = array<i64: 1, 128, 128>}, {transform_indices = @transform_2, window_bounds = array<i64: 1, 1, 128>}, {transform_indices = @transform_3, window_bounds = array<i64: 1, 128>}, {transform_indices = @transform_4, window_bounds = array<i64: 1, 64, 128>}, {transform_indices = @transform_5, window_bounds = array<i64: 1, 64, 128>}]} {
    %c0 = arith.constant 0 : index
    %c0_0 = arith.constant 0 : index
    %c0_1 = arith.constant 0 : index
    %0 = vector.load %arg3[%c0, %c0_0, %c0_1] : memref<1x64x128xbf16, #tpu.memory_space<vmem>>, vector<1x64x128xbf16>
    %1 = vector.shape_cast %0 : vector<1x64x128xbf16> to vector<64x128xbf16>
    %c0_2 = arith.constant 0 : index
    %c0_3 = arith.constant 0 : index
    %c0_4 = arith.constant 0 : index
    %2 = vector.load %arg4[%c0_2, %c0_3, %c0_4] : memref<1x128x128xbf16, #tpu.memory_space<vmem>>, vector<1x128x128xbf16>
    %3 = vector.shape_cast %2 : vector<1x128x128xbf16> to vector<128x128xbf16>
    %cst = arith.constant dense<0.000000e+00> : vector<64x128xf32>
    %4 = tpu.matmul %1, %3, %cst {dimension_numbers = #tpu.dot_dimension_numbers<[1], [0], [0], [1], [0, 0, 1, 1], [], []>} : vector<64x128xbf16>, vector<128x128xbf16>, vector<64x128xf32> -> vector<64x128xf32>
    %c0_5 = arith.constant 0 : index
    %c0_6 = arith.constant 0 : index
    %c0_7 = arith.constant 0 : index
    %5 = vector.load %arg5[%c0_5, %c0_6, %c0_7] : memref<1x1x128xf32, #tpu.memory_space<vmem>>, vector<1x1x128xf32>
    %6 = vector.shape_cast %5 : vector<1x1x128xf32> to vector<1x128xf32>
    %7 = vector.broadcast %6 : vector<1x128xf32> to vector<64x128xf32>
    %8 = arith.mulf %4, %7 : vector<64x128xf32>
    %c0_8 = arith.constant 0 : index
    %c0_9 = arith.constant 0 : index
    %9 = vector.load %arg6[%c0_8, %c0_9] : memref<1x128xf32, #tpu.memory_space<vmem>>, vector<1x128xf32>
    %10 = vector.broadcast %9 : vector<1x128xf32> to vector<64x128xf32>
    %11 = arith.addf %8, %10 : vector<64x128xf32>
    %c0_10 = arith.constant 0 : index
    %c0_11 = arith.constant 0 : index
    %c0_12 = arith.constant 0 : index
    %12 = vector.load %arg7[%c0_10, %c0_11, %c0_12] : memref<1x64x128xf32, #tpu.memory_space<vmem>>, vector<1x64x128xf32>
    %13 = vector.shape_cast %12 : vector<1x64x128xf32> to vector<64x128xf32>
    %14 = arith.addf %11, %13 : vector<64x128xf32>
    %cst_13 = arith.constant 0.000000e+00 : f32
    %15 = vector.broadcast %cst_13 : f32 to vector<64x128xf32>
    %16 = arith.maximumf %14, %15 : vector<64x128xf32>
    %c0_14 = arith.constant 0 : index
    %c0_15 = arith.constant 0 : index
    %c0_16 = arith.constant 0 : index
    %17 = vector.load %arg8[%c0_14, %c0_15, %c0_16] : memref<1x64x128xf32, #tpu.memory_space<vmem>>, vector<1x64x128xf32>
    %18 = vector.shape_cast %17 : vector<1x64x128xf32> to vector<64x128xf32>
    %19 = vector.shape_cast %16 : vector<64x128xf32> to vector<1x64x128xf32>
    tpu.vector_store %arg8[%c0_14, %c0_15, %c0_16], %19 {strides = array<i32>} : memref<1x64x128xf32, #tpu.memory_space<vmem>>, vector<1x64x128xf32>,
    return
  }
  func.func @transform_0(%arg0: i32, %arg1: i32, %arg2: i32) -> (i32, i32, i32) {
    %c0_i32 = arith.constant 0 : i32
    %c0_i32_0 = arith.constant 0 : i32
    return %arg0, %arg1, %c0_i32 : i32, i32, i32
  }
  func.func @transform_1(%arg0: i32, %arg1: i32, %arg2: i32) -> (i32, i32, i32) {
    %c0_i32 = arith.constant 0 : i32
    %c0_i32_0 = arith.constant 0 : i32
    return %arg0, %c0_i32, %arg2 : i32, i32, i32
  }
  func.func @transform_2(%arg0: i32, %arg1: i32, %arg2: i32) -> (i32, i32, i32) {
    %c0_i32 = arith.constant 0 : i32
    %c0_i32_0 = arith.constant 0 : i32
    return %arg0, %c0_i32, %arg2 : i32, i32, i32
  }
  func.func @transform_3(%arg0: i32, %arg1: i32, %arg2: i32) -> (i32, i32) {
    %c0_i32 = arith.constant 0 : i32
    %c0_i32_0 = arith.constant 0 : i32
    return %c0_i32, %arg2 : i32, i32
  }
  func.func @transform_4(%arg0: i32, %arg1: i32, %arg2: i32) -> (i32, i32, i32) {
    %c0_i32 = arith.constant 0 : i32
    return %arg0, %arg1, %arg2 : i32, i32, i32
  }
  func.func @transform_5(%arg0: i32, %arg1: i32, %arg2: i32) -> (i32, i32, i32) {
    %c0_i32 = arith.constant 0 : i32
    return %arg0, %arg1, %arg2 : i32, i32, i32
  }
}

</mosaic_0001>

<llo_original>
// kernel: mul.57
$region0: #{mul.57}
  %s0 = inlined_call_operand.vmem [shape: f32[2,9], index: 0, kind: input, shape index: {}]
  %s1 = inlined_call_operand.vmem [shape: f32[2,3,3], index: 1, kind: output, shape index: {}]
  $region1: #{mul.57} parent=0
    #allocation0 [shape = 'u8[8192]{0}', space=vmem, size = 0x2000, scoped, tag = 'scoped mem for output reshape']
    #allocation1 [shape = 'u8[4096]{0}', space=vmem, size = 0x1000, scoped, tag = 'scoped mem for input reshape']
    %s3 = sshll.u32 1, 2
    %s4 = ssub.s32 %s3, 1
    %v5 = vld [vmem:[%s0] sm:%s4]
    %6 = vst [vmem:[#allocation1] sm:%s4] %v5
    %v7 = vld [vmem:[#allocation1] sm:$0x3]
    %vm8 = vcmask 23552
    %9 = vst.msk [vmem:[#allocation0] ss:$8 sm:$0x3] %vm8, %v7
    %v10 = vld [vmem:[#allocation1] sm:$0x3]
    %11 = vrot.lane.b32.xlu0 %v10, 125
    %v12 = vpop.permute.xlu0 %11
    %vm13 = vcmask 23552
    %s14 = scalar_lea.vmem [#allocation0], 1
    %15 = vst.msk [vmem:[%s14] ss:$8 sm:$0x3] %vm13, %v12
    %v16 = vld [vmem:[#allocation1] sm:$0x3]
    %17 = vrot.lane.b32.xlu0 %v16, 122
    %v18 = vpop.permute.xlu0 %17
    %vm19 = vcmask 23552
    %s20 = scalar_lea.vmem [#allocation0], 2
    %21 = vst.msk [vmem:[%s20] ss:$8 sm:$0x3] %vm19, %v18
    %s23 = sshll.u32 1, 4
    %s24 = ssub.s32 %s23, 1
    %v26 = vld [vmem:[#allocation0] sm:%s24]
    %s27 = sshll.u32 1, 4
    %s28 = ssub.s32 %s27, 1
    %29 = vst [vmem:[%s1] sm:%s28] %v26
    %s30 = scalar_lea.vmem [#allocation0], 8
    %v31 = vld [vmem:[%s30] sm:%s24]
    %s32 = sshll.u32 1, 4
    %s33 = ssub.s32 %s32, 1
    %s34 = scalar_lea.vmem %s1, 4
    %35 = vst [vmem:[%s34] sm:%s33] %v31

// kernel: _lambda_.3
$region0: #{_lambda_.3}
  #allocation0 [shape = 'u32[]', space=smem, size = 0x4, offset = 0x4, fixed_abs, tag = 'smem constant byte address 0x4 - core index']
  #allocation1 [shape = 'u32[144,128]{1,0:T(1,128)}', space=vmem, size = 0x12000, scoped, tag = 'internal scratch']
  %s0 = inlined_call_operand.vmem [shape: bf16[2,64,128], index: 0, kind: input, shape index: {}]
  %s1 = inlined_call_operand.vmem [shape: bf16[2,128,128], index: 1, kind: input, shape index: {}]
  %s2 = inlined_call_operand.vmem [shape: f32[2,1,128], index: 2, kind: input, shape index: {}]
  %s3 = inlined_call_operand.vmem [shape: f32[1,128], index: 3, kind: input, shape index: {}]
  %s4 = inlined_call_operand.vmem [shape: f32[2,64,128], index: 4, kind: output, shape index: {}]
  %s5 = sld [smem:[#allocation0]]
  $region49: #{_lambda_.3} parent=0
    _
  %s7 = ssub.s32 1, %s5
  %s8 = scalar_select 0, %s7, %s5
  loop: start=0, step=1, limit=4
  $region2: #{_lambda_.3} parent=0 // loop_pre_header
    _
  $region3: #{_lambda_.3} parent=0 // loop_header
    %s10 = sphi 0, %s14
    %p11 = scmp.ge.s32.totalorder %s10, 4
    %s17 = sphi 0, %s36
    %s18 = sphi 0, %s32
    %s19 = sphi 0, %s28
    %s20 = sphi 0, %s17
    %s21 = sphi 0, %s18
    %s22 = sphi 0, %s19
    %s23 = sphi 0, %s20
    %s24 = sphi 0, %s21
    %s25 = sphi 0, %s22
    %s41 = sphi 0, %s43
    %s44 = sphi 0, %s41
    %s45 = sphi 0, %s44
    %s61 = sphi 0, %s45
    %s69 = sphi 0, %s71
    %s72 = sphi 0, %s69
    %s73 = sphi 0, %s72
    %s89 = sphi 0, %s73
    %s97 = sphi 0, %s99
    %s100 = sphi 0, %s97
    %s101 = sphi 0, %s100
    %s117 = sphi 0, %s101
    %s123 = sphi 0, %s125
    %s126 = sphi 0, %s123
    %s127 = sphi 0, %s126
    %s143 = sphi 0, %s127
    %s153 = sphi 0, %s155
    %s156 = sphi 0, %s153
    %s157 = sphi 0, %s156
    %s173 = sphi 0, %s157
  $region4: #{_lambda_.3} parent=0 // loop_header_branch
    %13 = sbr.rel (%p11) target = $region8
  $region5: #{_lambda_.3} parent=0 // loop_body
    %s15 = ssub.s32 %s10, 1
    %s16 = ssub.s32 %s10, 2
    %s26 = sadd.s32 1, %s19
    %p27 = scmp.ge.s32.totalorder %s26, 1
    %s28 = scalar_select %p27, 0, %s26
    %s29 = sadd.s32 1, %s18
    %s30 = scalar_select %p27, %s29, %s18
    %p31 = scmp.ge.s32.totalorder %s30, 1
    %s32 = scalar_select %p31, 0, %s30
    %s33 = sadd.s32 1, %s17
    %s34 = scalar_select %p31, %s33, %s17
    %p35 = scmp.ge.s32.totalorder %s34, 2
    %s36 = scalar_select %p35, 0, %s34
    %s37 = ssub.s32 %s17, %s36
    %s38 = ssub.s32 %s18, %s32
    %s39 = sor.u32 %s37, %s38
    %p40 = scmp.eq.s32.totalorder %s39, 0
    %s42 = sadd.s32 %s41, 1
    %s43 = scalar_select %p40, %s41, %s42
    %p46 = pneg %p40
    %p47 = scmp.eq.s32.totalorder %s10, 1
    %p48 = por %p46, %p47
    %p49 = scmp.ne.s32.totalorder %s41, %s44
    %p50 = scmp.eq.s32.totalorder %s10, 0
    %p51 = por %p49, %p50
    %p52 = scmp.ne.s32.totalorder %s41, %s44
    %p53 = scmp.eq.s32.totalorder %s15, 1
    %p54 = por %p52, %p53
    %p55 = scmp.ne.s32.totalorder %s44, %s45
    %p56 = scmp.eq.s32.totalorder %s15, 0
    %p57 = por %p55, %p56
    %p58 = scmp.ne.s32.totalorder %s44, %s45
    %p59 = scmp.eq.s32.totalorder %s16, 1
    %p60 = por %p58, %p59
    %p62 = scmp.ne.s32.totalorder %s45, %s61
    %p63 = scmp.eq.s32.totalorder %s16, 0
    %p64 = por %p62, %p63
    %s65 = ssub.s32 %s17, %s36
    %s66 = ssub.s32 %s19, %s28
    %s67 = sor.u32 %s65, %s66
    %p68 = scmp.eq.s32.totalorder %s67, 0
    %s70 = sadd.s32 %s69, 1
    %s71 = scalar_select %p68, %s69, %s70
    %p74 = pneg %p68
    %p75 = scmp.eq.s32.totalorder %s10, 1
    %p76 = por %p74, %p75
    %p77 = scmp.ne.s32.totalorder %s69, %s72
    %p78 = scmp.eq.s32.totalorder %s10, 0
    %p79 = por %p77, %p78
    %p80 = scmp.ne.s32.totalorder %s69, %s72
    %p81 = scmp.eq.s32.totalorder %s15, 1
    %p82 = por %p80, %p81
    %p83 = scmp.ne.s32.totalorder %s72, %s73
    %p84 = scmp.eq.s32.totalorder %s15, 0
    %p85 = por %p83, %p84
    %p86 = scmp.ne.s32.totalorder %s72, %s73
    %p87 = scmp.eq.s32.totalorder %s16, 1
    %p88 = por %p86, %p87
    %p90 = scmp.ne.s32.totalorder %s73, %s89
    %p91 = scmp.eq.s32.totalorder %s16, 0
    %p92 = por %p90, %p91
    %s93 = ssub.s32 %s17, %s36
    %s94 = ssub.s32 %s19, %s28
    %s95 = sor.u32 %s93, %s94
    %p96 = scmp.eq.s32.totalorder %s95, 0
    %s98 = sadd.s32 %s97, 1
    %s99 = scalar_select %p96, %s97, %s98
    %p102 = pneg %p96
    %p103 = scmp.eq.s32.totalorder %s10, 1
    %p104 = por %p102, %p103
    %p105 = scmp.ne.s32.totalorder %s97, %s100
    %p106 = scmp.eq.s32.totalorder %s10, 0
    %p107 = por %p105, %p106
    %p108 = scmp.ne.s32.totalorder %s97, %s100
    %p109 = scmp.eq.s32.totalorder %s15, 1
    %p110 = por %p108, %p109
    %p111 = scmp.ne.s32.totalorder %s100, %s101
    %p112 = scmp.eq.s32.totalorder %s15, 0
    %p113 = por %p111, %p112
    %p114 = scmp.ne.s32.totalorder %s100, %s101
    %p115 = scmp.eq.s32.totalorder %s16, 1
    %p116 = por %p114, %p115
    %p118 = scmp.ne.s32.totalorder %s101, %s117
    %p119 = scmp.eq.s32.totalorder %s16, 0
    %p120 = por %p118, %p119
    %s121 = ssub.s32 %s19, %s28
    %p122 = scmp.eq.s32.totalorder %s121, 0
    %s124 = sadd.s32 %s123, 1
    %s125 = scalar_select %p122, %s123, %s124
    %p128 = pneg %p122
    %p129 = scmp.eq.s32.totalorder %s10, 1
    %p130 = por %p128, %p129
    %p131 = scmp.ne.s32.totalorder %s123, %s126
    %p132 = scmp.eq.s32.totalorder %s10, 0
    %p133 = por %p131, %p132
    %p134 = scmp.ne.s32.totalorder %s123, %s126
    %p135 = scmp.eq.s32.totalorder %s15, 1
    %p136 = por %p134, %p135
    %p137 = scmp.ne.s32.totalorder %s126, %s127
    %p138 = scmp.eq.s32.totalorder %s15, 0
    %p139 = por %p137, %p138
    %p140 = scmp.ne.s32.totalorder %s126, %s127
    %p141 = scmp.eq.s32.totalorder %s16, 1
    %p142 = por %p140, %p141
    %p144 = scmp.ne.s32.totalorder %s127, %s143
    %p145 = scmp.eq.s32.totalorder %s16, 0
    %p146 = por %p144, %p145
    %s147 = ssub.s32 %s17, %s36
    %s148 = ssub.s32 %s18, %s32
    %s149 = sor.u32 %s147, %s148
    %s150 = ssub.s32 %s19, %s28
    %s151 = sor.u32 %s149, %s150
    %p152 = scmp.eq.s32.totalorder %s151, 0
    %s154 = sadd.s32 %s153, 1
    %s155 = scalar_select %p152, %s153, %s154
    %p158 = pneg %p152
    %p159 = scmp.eq.s32.totalorder %s10, 1
    %p160 = por %p158, %p159
    %p161 = scmp.ne.s32.totalorder %s153, %s156
    %p162 = scmp.eq.s32.totalorder %s10, 0
    %p163 = por %p161, %p162
    %p164 = scmp.ne.s32.totalorder %s153, %s156
    %p165 = scmp.eq.s32.totalorder %s15, 1
    %p166 = por %p164, %p165
    %p167 = scmp.ne.s32.totalorder %s156, %s157
    %p168 = scmp.eq.s32.totalorder %s15, 0
    %p169 = por %p167, %p168
    %p170 = scmp.ne.s32.totalorder %s156, %s157
    %p171 = scmp.eq.s32.totalorder %s16, 1
    %p172 = por %p170, %p171
    %p174 = scmp.ne.s32.totalorder %s157, %s173
    %p175 = scmp.eq.s32.totalorder %s16, 0
    %p176 = por %p174, %p175
    %p177 = scmp.le.s32.totalorder 1, %s10
    %p178 = scmp.lt.s32.totalorder %s10, 3
    %p179 = pnand %p177, %p178
    %p180 = pneg %p179
    // Predicated region
    $region9: #{_lambda_.3} parent=5 // pred_check
      _
    $region10: #{_lambda_.3} parent=5 // pred_check_branch
      %182 = sbr.rel (%p179) target = $region12
    $region11: #{_lambda_.3} parent=5 // pred_region
      %s183 = ssub.s32 %s10, 1
      // Predicated region
      $region13: #{_lambda_.3} parent=11 // pred_check
        %p184 = pneg %p139
      $region14: #{_lambda_.3} parent=11 // pred_check_branch
        %186 = sbr.rel (%p184) target = $region16
      $region15: #{_lambda_.3} parent=11 // pred_region
        %p187 = scmp.lt.s32.totalorder %s22, 0
        %s188 = scalar_select %p187, %s22, 0
        %s189 = scalar_lea.vmem %s3, %s188
      $region16: #{_lambda_.3} parent=11 // pred_fallthru
        _
    $region12: #{_lambda_.3} parent=5 // pred_fallthru
      _
    %p190 = scmp.lt.s32.totalorder %s10, 2
    // Predicated region
    $region17: #{_lambda_.3} parent=5 // pred_check
      %p191 = pneg %p190
    $region18: #{_lambda_.3} parent=5 // pred_check_branch
      %193 = sbr.rel (%p191) target = $region20
    $region19: #{_lambda_.3} parent=5 // pred_region
      // Predicated region
      $region21: #{_lambda_.3} parent=19 // pred_check
        %p194 = pneg %p51
      $region22: #{_lambda_.3} parent=19 // pred_check_branch
        %196 = sbr.rel (%p194) target = $region24
      $region23: #{_lambda_.3} parent=19 // pred_region
        %s197 = smul.u32 8, %s18
        %p198 = scmp.lt.s32.totalorder %s17, 1
        %s199 = scalar_select %p198, %s17, 1
        %p200 = scmp.lt.s32.totalorder %s197, 7
        %s201 = scalar_select %p200, %s197, 7
        %s202 = smul.addr %s199, 8
        %s203 = sadd.s32 %s201, %s202
        %s204 = smul.addr %s203, 4
        %s205 = scalar_lea.vmem %s0, %s204
        %s206 = smul.u32 8, %s18
      $region24: #{_lambda_.3} parent=19 // pred_fallthru
        _
      // Predicated region
      $region25: #{_lambda_.3} parent=19 // pred_check
        %p207 = pneg %p79
      $region26: #{_lambda_.3} parent=19 // pred_check_branch
        %209 = sbr.rel (%p207) target = $region28
      $region27: #{_lambda_.3} parent=19 // pred_region
        %p210 = scmp.lt.s32.totalorder %s17, 1
        %s211 = scalar_select %p210, %s17, 1
        %p212 = scmp.lt.s32.totalorder %s19, 0
        %s213 = scalar_select %p212, %s19, 0
        %s214 = smul.addr %s211, 16
        %s215 = sadd.s32 %s213, %s214
        %s216 = smul.addr %s215, 4
        %s217 = scalar_lea.vmem %s1, %s216
      $region28: #{_lambda_.3} parent=19 // pred_fallthru
        _
      // Predicated region
      $region29: #{_lambda_.3} parent=19 // pred_check
        %p218 = pneg %p107
      $region30: #{_lambda_.3} parent=19 // pred_check_branch
        %220 = sbr.rel (%p218) target = $region32
      $region31: #{_lambda_.3} parent=19 // pred_region
        %p221 = scmp.lt.s32.totalorder %s17, 1
        %s222 = scalar_select %p221, %s17, 1
        %p223 = scmp.lt.s32.totalorder %s19, 0
        %s224 = scalar_select %p223, %s19, 0
        %s225 = sadd.s32 %s224, %s222
        %s226 = scalar_lea.vmem %s2, %s225
      $region32: #{_lambda_.3} parent=19 // pred_fallthru
        _
    $region20: #{_lambda_.3} parent=5 // pred_fallthru
      _
    %p227 = scmp.le.s32.totalorder 1, %s10
    %p228 = scmp.lt.s32.totalorder %s10, 3
    %p229 = pnand %p227, %p228
    %p230 = pneg %p229
    // Predicated region
    $region33: #{_lambda_.3} parent=5 // pred_check
      _
    $region34: #{_lambda_.3} parent=5 // pred_check_branch
      %232 = sbr.rel (%p229) target = $region36
    $region35: #{_lambda_.3} parent=5 // pred_region
      %s233 = ssub.s32 %s10, 1
      %s234 = smul.u32 8, %s21
      %p235 = scmp.lt.s32.totalorder %s20, 1
      %s236 = scalar_select %p235, %s20, 1
      %p237 = scmp.lt.s32.totalorder %s234, 7
      %s238 = scalar_select %p237, %s234, 7
      %s239 = smul.addr %s236, 8
      %s240 = sadd.s32 %s238, %s239
      %s241 = smul.addr %s240, 4
      %s242 = scalar_lea.vmem %s0, %s241
      %p243 = pneg %p57
      %p244 = pneg %p54
      %p245 = scmp.lt.s32.totalorder %s20, 1
      %s246 = scalar_select %p245, %s20, 1
      %p247 = scmp.lt.s32.totalorder %s22, 0
      %s248 = scalar_select %p247, %s22, 0
      %s249 = smul.addr %s246, 16
      %s250 = sadd.s32 %s248, %s249
      %s251 = smul.addr %s250, 4
      %s252 = scalar_lea.vmem %s1, %s251
      %p253 = pneg %p85
      %p254 = pneg %p82
      %p255 = scmp.lt.s32.totalorder %s20, 1
      %s256 = scalar_select %p255, %s20, 1
      %p257 = scmp.lt.s32.totalorder %s22, 0
      %s258 = scalar_select %p257, %s22, 0
      %s259 = sadd.s32 %s258, %s256
      %s260 = scalar_lea.vmem %s2, %s259
      %p261 = pneg %p113
      %p262 = pneg %p110
      %p263 = scmp.lt.s32.totalorder %s22, 0
      %s264 = scalar_select %p263, %s22, 0
      %s265 = scalar_lea.vmem %s3, %s264
      %p266 = pneg %p139
      %p267 = pneg %p136
      %p268 = pneg %p169
      %p269 = pneg %p166
      %s270 = smul.u32 8, %s21
      %p271 = scmp.lt.s32.totalorder %s20, 1
      %s272 = scalar_select %p271, %s20, 1
      %p273 = scmp.lt.s32.totalorder %s270, 7
      %s274 = scalar_select %p273, %s270, 7
      %p275 = scmp.lt.s32.totalorder %s22, 0
      %s276 = scalar_select %p275, %s22, 0
      %s277 = sadd.s32 %s276, %s274
      %s278 = smul.addr %s272, 8
      %s279 = sadd.s32 %s277, %s278
      %s280 = smul.addr %s279, 8
      %s281 = scalar_lea.vmem %s4, %s280
      %s282 = smul.u32 8, %s21
      %p283 = scmp.lt.s32.totalorder %s20, 1
      %s284 = scalar_select %p283, %s20, 1
      %p285 = scmp.lt.s32.totalorder %s282, 7
      %s286 = scalar_select %p285, %s282, 7
      %s287 = smul.addr %s284, 8
      %s288 = sadd.s32 %s286, %s287
      %s289 = smul.addr %s288, 4
      %s290 = scalar_lea.vmem %s0, %s289
      %s291 = smul.u32 8, %s21
      %p292 = scmp.lt.s32.totalorder %s20, 1
      %s293 = scalar_select %p292, %s20, 1
      %p294 = scmp.lt.s32.totalorder %s22, 0
      %s295 = scalar_select %p294, %s22, 0
      %s296 = smul.addr %s293, 16
      %s297 = sadd.s32 %s295, %s296
      %s298 = smul.addr %s297, 4
      %s299 = scalar_lea.vmem %s1, %s298
      %p300 = scmp.lt.s32.totalorder %s20, 1
      %s301 = scalar_select %p300, %s20, 1
      %p302 = scmp.lt.s32.totalorder %s22, 0
      %s303 = scalar_select %p302, %s22, 0
      %s304 = sadd.s32 %s303, %s301
      %s305 = scalar_lea.vmem %s2, %s304
      %p306 = scmp.lt.s32.totalorder %s22, 0
      %s307 = scalar_select %p306, %s22, 0
      %s308 = scalar_lea.vmem %s3, %s307
      %s309 = smul.u32 8, %s21
      %p310 = scmp.lt.s32.totalorder %s20, 1
      %s311 = scalar_select %p310, %s20, 1
      %p312 = scmp.lt.s32.totalorder %s309, 7
      %s313 = scalar_select %p312, %s309, 7
      %p314 = scmp.lt.s32.totalorder %s22, 0
      %s315 = scalar_select %p314, %s22, 0
      %s316 = sadd.s32 %s315, %s313
      %s317 = smul.addr %s311, 8
      %s318 = sadd.s32 %s316, %s317
      %s319 = smul.addr %s318, 8
      %s320 = scalar_lea.vmem %s4, %s319
      %s321 = smul.u32 8, %s21
      %v323 = vld [vmem:[%s290] sm:$0xf]
      %v324 = vld [vmem:[%s290 + $0x4] sm:$0xf]
      %v325 = vld [vmem:[%s290 + $0x8] sm:$0xf]
      %v326 = vld [vmem:[%s290 + $0xc] sm:$0xf]
      %v327 = vld [vmem:[%s290 + $0x10] sm:$0xf]
      %v328 = vld [vmem:[%s290 + $0x14] sm:$0xf]
      %v329 = vld [vmem:[%s290 + $0x18] sm:$0xf]
      %v330 = vld [vmem:[%s290 + $0x1c] sm:$0xf]
      %v331 = vld [vmem:[%s299] sm:$0xf]
      %v332 = vld [vmem:[%s299 + $0x4] sm:$0xf]
      %v333 = vld [vmem:[%s299 + $0x8] sm:$0xf]
      %v334 = vld [vmem:[%s299 + $0xc] sm:$0xf]
      %v335 = vld [vmem:[%s299 + $0x10] sm:$0xf]
      %v336 = vld [vmem:[%s299 + $0x14] sm:$0xf]
      %v337 = vld [vmem:[%s299 + $0x18] sm:$0xf]
      %v338 = vld [vmem:[%s299 + $0x1c] sm:$0xf]
      %v339 = vld [vmem:[%s299 + $0x20] sm:$0xf]
      %v340 = vld [vmem:[%s299 + $0x24] sm:$0xf]
      %v341 = vld [vmem:[%s299 + $0x28] sm:$0xf]
      %v342 = vld [vmem:[%s299 + $0x2c] sm:$0xf]
      %v343 = vld [vmem:[%s299 + $0x30] sm:$0xf]
      %v344 = vld [vmem:[%s299 + $0x34] sm:$0xf]
      %v345 = vld [vmem:[%s299 + $0x38] sm:$0xf]
      %v346 = vld [vmem:[%s299 + $0x3c] sm:$0xf]
      %v355 = vunpack.c.l.b16 %v323
      %v356 = vunpack.c.l.b16 %v324
      %v357 = vunpack.c.l.b16 %v325
      %v358 = vunpack.c.l.b16 %v326
      %v359 = vunpack.c.l.b16 %v327
      %v360 = vunpack.c.l.b16 %v328
      %v361 = vunpack.c.l.b16 %v329
      %v362 = vunpack.c.l.b16 %v330
      %v363 = vpack.c.b16 %v356, %v355
      %v364 = vpack.c.b16 %v358, %v357
      %v365 = vpack.c.b16 %v360, %v359
      %v366 = vpack.c.b16 %v362, %v361
      %v387 = vunpack.c.l.b16 %v331
      %v388 = vunpack.c.l.b16 %v332
      %v389 = vunpack.c.l.b16 %v333
      %v390 = vunpack.c.l.b16 %v334
      %v391 = vunpack.c.l.b16 %v335
      %v392 = vunpack.c.l.b16 %v336
      %v393 = vunpack.c.l.b16 %v337
      %v394 = vunpack.c.l.b16 %v338
      %v395 = vunpack.c.l.b16 %v339
      %v396 = vunpack.c.l.b16 %v340
      %v397 = vunpack.c.l.b16 %v341
      %v398 = vunpack.c.l.b16 %v342
      %v399 = vunpack.c.l.b16 %v343
      %v400 = vunpack.c.l.b16 %v344
      %v401 = vunpack.c.l.b16 %v345
      %v402 = vunpack.c.l.b16 %v346
      %v403 = vpack.c.b16 %v388, %v387
      %v404 = vpack.c.b16 %v390, %v389
      %v405 = vpack.c.b16 %v392, %v391
      %v406 = vpack.c.b16 %v394, %v393
      %v407 = vpack.c.b16 %v396, %v395
      %v408 = vpack.c.b16 %v398, %v397
      %v409 = vpack.c.b16 %v400, %v399
      %v410 = vpack.c.b16 %v402, %v401
      %419 = vmatprep.subr.bf16.mxu0 0
      %420 = vmatpush1.bf16.msra.mxu0 %v410
      %421 = vmatprep.subr.bf16.mxu0 0
      %422 = vmatpush1.bf16.msra.mxu0 %v409
      %423 = vmatprep.subr.bf16.mxu0 0
      %424 = vmatpush1.bf16.msra.mxu0 %v408
      %425 = vmatprep.subr.bf16.mxu0 0
      %426 = vmatpush1.bf16.msra.mxu0 %v407
      %427 = vmatprep.subr.bf16.mxu0 0
      %428 = vmatpush1.bf16.msra.mxu0 %v406
      %429 = vmatprep.subr.bf16.mxu0 0
      %430 = vmatpush1.bf16.msra.mxu0 %v405
      %431 = vmatprep.subr.bf16.mxu0 0
      %432 = vmatpush1.bf16.msra.mxu0 %v404
      %433 = vmatprep.subr.bf16.mxu0 0
      %434 = vmatpush1.bf16.msra.mxu0 %v403
      %435 = vmatprep.subr.bf16.mxu0 0
      %436 = vmatpush2.bf16.msra.mxu0 0
      %437 = vmatprep.subr.bf16.mxu0 0
      %438 = vmatpush2.bf16.msra.mxu0 0
      %439 = vmatprep.subr.bf16.mxu0 0
      %440 = vmatpush2.bf16.msra.mxu0 0
      %441 = vmatprep.subr.bf16.mxu0 0
      %442 = vmatpush2.bf16.msra.mxu0 0
      %443 = vmatprep.subr.bf16.mxu0 0
      %444 = vmatpush2.bf16.msra.mxu0 0
      %445 = vmatprep.subr.bf16.mxu0 0
      %446 = vmatpush2.bf16.msra.mxu0 0
      %447 = vmatprep.subr.bf16.mxu0 0
      %448 = vmatpush2.bf16.msra.mxu0 0
      %449 = vmatprep.subr.bf16.mxu0 0
      %450 = vmatpush2.bf16.msra.mxu0 0
      %451 = vmatprep.mubr.bf16.mxu0 0
      %452 = vmatmul.mubr.bf16.gmra.mxu0 %v363
      %v453 = vpop.f32.mrf.mxu0
      %v454 = vadd.f32 0.0, %v453
      %v455 = vpop.f32.mrf.mxu0
      %v456 = vpop.f32.mrf.mxu0
      %v457 = vadd.f32 0.0, %v456
      %v458 = vpop.f32.mrf.mxu0
      %459 = vmatprep.mubr.bf16.mxu0 0
      %460 = vmatmul.mubr.bf16.gmra.mxu0 %v364
      %v461 = vpop.f32.mrf.mxu0
      %v462 = vadd.f32 0.0, %v461
      %v463 = vpop.f32.mrf.mxu0
      %v464 = vpop.f32.mrf.mxu0
      %v465 = vadd.f32 0.0, %v464
      %v466 = vpop.f32.mrf.mxu0
      %467 = vmatprep.mubr.bf16.mxu0 0
      %468 = vmatmul.mubr.bf16.gmra.mxu0 %v365
      %v469 = vpop.f32.mrf.mxu0
      %v470 = vadd.f32 0.0, %v469
      %v471 = vpop.f32.mrf.mxu0
      %v472 = vpop.f32.mrf.mxu0
      %v473 = vadd.f32 0.0, %v472
      %v474 = vpop.f32.mrf.mxu0
      %475 = vmatprep.mubr.bf16.mxu0 0
      %476 = vmatmul.mubr.bf16.gmra.mxu0 %v366
      %v477 = vpop.f32.mrf.mxu0
      %v478 = vadd.f32 0.0, %v477
      %v479 = vpop.f32.mrf.mxu0
      %v480 = vpop.f32.mrf.mxu0
      %v481 = vadd.f32 0.0, %v480
      %v482 = vpop.f32.mrf.mxu0
      %483 = vdwg.mxu0
      %v484 = vld [vmem:[%s305] sm:$0x1]
      %v486 = vlaneseq
      %v487 = vshrl.u32 %v486, 7
      %v488 = vsub.s32 0, %v487
      %v489 = vrot.slane %v484, %v488
      %v491 = vmul.f32 %v454, %v489
      %v492 = vmul.f32 %v457, %v489
      %v493 = vmul.f32 %v462, %v489
      %v494 = vmul.f32 %v465, %v489
      %v495 = vmul.f32 %v470, %v489
      %v496 = vmul.f32 %v473, %v489
      %v497 = vmul.f32 %v478, %v489
      %v498 = vmul.f32 %v481, %v489
      %v499 = vld [vmem:[%s308] sm:$0x1]
      %v501 = vlaneseq
      %v502 = vshrl.u32 %v501, 7
      %v503 = vsub.s32 0, %v502
      %v504 = vrot.slane %v499, %v503
      %v506 = vadd.f32 %v491, %v504
      %v507 = vadd.f32 %v492, %v504
      %v508 = vadd.f32 %v493, %v504
      %v509 = vadd.f32 %v494, %v504
      %v510 = vadd.f32 %v495, %v504
      %v511 = vadd.f32 %v496, %v504
      %v512 = vadd.f32 %v497, %v504
      %v513 = vadd.f32 %v498, %v504
      %v514 = vmax.f32 %v506, 0.0
      %v515 = vmax.f32 %v507, 0.0
      %v516 = vmax.f32 %v508, 0.0
      %v517 = vmax.f32 %v509, 0.0
      %v518 = vmax.f32 %v510, 0.0
      %v519 = vmax.f32 %v511, 0.0
      %v520 = vmax.f32 %v512, 0.0
      %v521 = vmax.f32 %v513, 0.0
      %522 = vst [vmem:[%s320] sm:$0xff] %v514
      %523 = vst [vmem:[%s320 + $0x8] sm:$0xff] %v515
      %524 = vst [vmem:[%s320 + $0x10] sm:$0xff] %v516
      %525 = vst [vmem:[%s320 + $0x18] sm:$0xff] %v517
      %526 = vst [vmem:[%s320 + $0x20] sm:$0xff] %v518
      %527 = vst [vmem:[%s320 + $0x28] sm:$0xff] %v519
      %528 = vst [vmem:[%s320 + $0x30] sm:$0xff] %v520
      %529 = vst [vmem:[%s320 + $0x38] sm:$0xff] %v521
      %s530 = smul.u32 8, %s21
      %p531 = scmp.lt.s32.totalorder %s20, 1
      %s532 = scalar_select %p531, %s20, 1
      %p533 = scmp.lt.s32.totalorder %s530, 7
      %s534 = scalar_select %p533, %s530, 7
      %p535 = scmp.lt.s32.totalorder %s22, 0
      %s536 = scalar_select %p535, %s22, 0
      %s537 = sadd.s32 %s536, %s534
      %s538 = smul.addr %s532, 8
      %s539 = sadd.s32 %s537, %s538
      %s540 = smul.addr %s539, 8
      %s541 = scalar_lea.vmem %s4, %s540
      // Predicated region
      $region37: #{_lambda_.3} parent=35 // pred_check
        %p542 = pneg %p166
      $region38: #{_lambda_.3} parent=35 // pred_check_branch
        %544 = sbr.rel (%p542) target = $region40
      $region39: #{_lambda_.3} parent=35 // pred_region
        %s545 = smul.u32 8, %s21
      $region40: #{_lambda_.3} parent=35 // pred_fallthru
        _
    $region36: #{_lambda_.3} parent=5 // pred_fallthru
      _
    %p546 = scmp.le.s32.totalorder 2, %s10
    // Predicated region
    $region41: #{_lambda_.3} parent=5 // pred_check
      %p547 = pneg %p546
    $region42: #{_lambda_.3} parent=5 // pred_check_branch
      %549 = sbr.rel (%p547) target = $region44
    $region43: #{_lambda_.3} parent=5 // pred_region
      %s550 = ssub.s32 %s10, 2
      // Predicated region
      $region45: #{_lambda_.3} parent=43 // pred_check
        %p551 = pneg %p172
      $region46: #{_lambda_.3} parent=43 // pred_check_branch
        %553 = sbr.rel (%p551) target = $region48
      $region47: #{_lambda_.3} parent=43 // pred_region
        %s554 = smul.u32 8, %s24
        %p555 = scmp.lt.s32.totalorder %s23, 1
        %s556 = scalar_select %p555, %s23, 1
        %p557 = scmp.lt.s32.totalorder %s554, 7
        %s558 = scalar_select %p557, %s554, 7
        %p559 = scmp.lt.s32.totalorder %s25, 0
        %s560 = scalar_select %p559, %s25, 0
        %s561 = sadd.s32 %s560, %s558
        %s562 = smul.addr %s556, 8
        %s563 = sadd.s32 %s561, %s562
        %s564 = smul.addr %s563, 8
        %s565 = scalar_lea.vmem %s4, %s564
      $region48: #{_lambda_.3} parent=43 // pred_fallthru
        _
    $region44: #{_lambda_.3} parent=5 // pred_fallthru
      _
  $region6: #{_lambda_.3} parent=0 // loop_footer
    %s14 = sadd.s32 1, %s10
  $region7: #{_lambda_.3} parent=0 // loop_footer_branch
    %9 = sbr.rel target = $region3
  $region8: #{_lambda_.3} parent=0 // loop_exit
    _

// kernel: _lambda_.5
$region0: #{_lambda_.5}
  #allocation0 [shape = 'u32[]', space=smem, size = 0x4, offset = 0x4, fixed_abs, tag = 'smem constant byte address 0x4 - core index']
  #allocation1 [shape = 'u32[144,128]{1,0:T(1,128)}', space=vmem, size = 0x12000, scoped, tag = 'internal scratch']
  %s0 = inlined_call_operand.vmem [shape: bf16[2,64,128], index: 0, kind: input, shape index: {}]
  %s1 = inlined_call_operand.vmem [shape: bf16[2,128,128], index: 1, kind: input, shape index: {}]
  %s2 = inlined_call_operand.vmem [shape: f32[2,1,128], index: 2, kind: input, shape index: {}]
  %s3 = inlined_call_operand.vmem [shape: f32[1,128], index: 3, kind: input, shape index: {}]
  %s4 = inlined_call_operand.vmem [shape: f32[2,64,128], index: 4, kind: input, shape index: {}]
  %s5 = inlined_call_operand.vmem [shape: f32[2,64,128], index: 5, kind: output, shape index: {}]
  %s6 = sld [smem:[#allocation0]]
  $region53: #{_lambda_.5} parent=0
    _
  %s8 = ssub.s32 1, %s6
  %s9 = scalar_select 0, %s8, %s6
  loop: start=0, step=1, limit=4
  $region2: #{_lambda_.5} parent=0 // loop_pre_header
    _
  $region3: #{_lambda_.5} parent=0 // loop_header
    %s11 = sphi 0, %s15
    %p12 = scmp.ge.s32.totalorder %s11, 4
    %s18 = sphi 0, %s37
    %s19 = sphi 0, %s33
    %s20 = sphi 0, %s29
    %s21 = sphi 0, %s18
    %s22 = sphi 0, %s19
    %s23 = sphi 0, %s20
    %s24 = sphi 0, %s21
    %s25 = sphi 0, %s22
    %s26 = sphi 0, %s23
    %s42 = sphi 0, %s44
    %s45 = sphi 0, %s42
    %s46 = sphi 0, %s45
    %s62 = sphi 0, %s46
    %s70 = sphi 0, %s72
    %s73 = sphi 0, %s70
    %s74 = sphi 0, %s73
    %s90 = sphi 0, %s74
    %s98 = sphi 0, %s100
    %s101 = sphi 0, %s98
    %s102 = sphi 0, %s101
    %s118 = sphi 0, %s102
    %s124 = sphi 0, %s126
    %s127 = sphi 0, %s124
    %s128 = sphi 0, %s127
    %s144 = sphi 0, %s128
    %s154 = sphi 0, %s156
    %s157 = sphi 0, %s154
    %s158 = sphi 0, %s157
    %s174 = sphi 0, %s158
    %s184 = sphi 0, %s186
    %s187 = sphi 0, %s184
    %s188 = sphi 0, %s187
    %s204 = sphi 0, %s188
  $region4: #{_lambda_.5} parent=0 // loop_header_branch
    %14 = sbr.rel (%p12) target = $region8
  $region5: #{_lambda_.5} parent=0 // loop_body
    %s16 = ssub.s32 %s11, 1
    %s17 = ssub.s32 %s11, 2
    %s27 = sadd.s32 1, %s20
    %p28 = scmp.ge.s32.totalorder %s27, 1
    %s29 = scalar_select %p28, 0, %s27
    %s30 = sadd.s32 1, %s19
    %s31 = scalar_select %p28, %s30, %s19
    %p32 = scmp.ge.s32.totalorder %s31, 1
    %s33 = scalar_select %p32, 0, %s31
    %s34 = sadd.s32 1, %s18
    %s35 = scalar_select %p32, %s34, %s18
    %p36 = scmp.ge.s32.totalorder %s35, 2
    %s37 = scalar_select %p36, 0, %s35
    %s38 = ssub.s32 %s18, %s37
    %s39 = ssub.s32 %s19, %s33
    %s40 = sor.u32 %s38, %s39
    %p41 = scmp.eq.s32.totalorder %s40, 0
    %s43 = sadd.s32 %s42, 1
    %s44 = scalar_select %p41, %s42, %s43
    %p47 = pneg %p41
    %p48 = scmp.eq.s32.totalorder %s11, 1
    %p49 = por %p47, %p48
    %p50 = scmp.ne.s32.totalorder %s42, %s45
    %p51 = scmp.eq.s32.totalorder %s11, 0
    %p52 = por %p50, %p51
    %p53 = scmp.ne.s32.totalorder %s42, %s45
    %p54 = scmp.eq.s32.totalorder %s16, 1
    %p55 = por %p53, %p54
    %p56 = scmp.ne.s32.totalorder %s45, %s46
    %p57 = scmp.eq.s32.totalorder %s16, 0
    %p58 = por %p56, %p57
    %p59 = scmp.ne.s32.totalorder %s45, %s46
    %p60 = scmp.eq.s32.totalorder %s17, 1
    %p61 = por %p59, %p60
    %p63 = scmp.ne.s32.totalorder %s46, %s62
    %p64 = scmp.eq.s32.totalorder %s17, 0
    %p65 = por %p63, %p64
    %s66 = ssub.s32 %s18, %s37
    %s67 = ssub.s32 %s20, %s29
    %s68 = sor.u32 %s66, %s67
    %p69 = scmp.eq.s32.totalorder %s68, 0
    %s71 = sadd.s32 %s70, 1
    %s72 = scalar_select %p69, %s70, %s71
    %p75 = pneg %p69
    %p76 = scmp.eq.s32.totalorder %s11, 1
    %p77 = por %p75, %p76
    %p78 = scmp.ne.s32.totalorder %s70, %s73
    %p79 = scmp.eq.s32.totalorder %s11, 0
    %p80 = por %p78, %p79
    %p81 = scmp.ne.s32.totalorder %s70, %s73
    %p82 = scmp.eq.s32.totalorder %s16, 1
    %p83 = por %p81, %p82
    %p84 = scmp.ne.s32.totalorder %s73, %s74
    %p85 = scmp.eq.s32.totalorder %s16, 0
    %p86 = por %p84, %p85
    %p87 = scmp.ne.s32.totalorder %s73, %s74
    %p88 = scmp.eq.s32.totalorder %s17, 1
    %p89 = por %p87, %p88
    %p91 = scmp.ne.s32.totalorder %s74, %s90
    %p92 = scmp.eq.s32.totalorder %s17, 0
    %p93 = por %p91, %p92
    %s94 = ssub.s32 %s18, %s37
    %s95 = ssub.s32 %s20, %s29
    %s96 = sor.u32 %s94, %s95
    %p97 = scmp.eq.s32.totalorder %s96, 0
    %s99 = sadd.s32 %s98, 1
    %s100 = scalar_select %p97, %s98, %s99
    %p103 = pneg %p97
    %p104 = scmp.eq.s32.totalorder %s11, 1
    %p105 = por %p103, %p104
    %p106 = scmp.ne.s32.totalorder %s98, %s101
    %p107 = scmp.eq.s32.totalorder %s11, 0
    %p108 = por %p106, %p107
    %p109 = scmp.ne.s32.totalorder %s98, %s101
    %p110 = scmp.eq.s32.totalorder %s16, 1
    %p111 = por %p109, %p110
    %p112 = scmp.ne.s32.totalorder %s101, %s102
    %p113 = scmp.eq.s32.totalorder %s16, 0
    %p114 = por %p112, %p113
    %p115 = scmp.ne.s32.totalorder %s101, %s102
    %p116 = scmp.eq.s32.totalorder %s17, 1
    %p117 = por %p115, %p116
    %p119 = scmp.ne.s32.totalorder %s102, %s118
    %p120 = scmp.eq.s32.totalorder %s17, 0
    %p121 = por %p119, %p120
    %s122 = ssub.s32 %s20, %s29
    %p123 = scmp.eq.s32.totalorder %s122, 0
    %s125 = sadd.s32 %s124, 1
    %s126 = scalar_select %p123, %s124, %s125
    %p129 = pneg %p123
    %p130 = scmp.eq.s32.totalorder %s11, 1
    %p131 = por %p129, %p130
    %p132 = scmp.ne.s32.totalorder %s124, %s127
    %p133 = scmp.eq.s32.totalorder %s11, 0
    %p134 = por %p132, %p133
    %p135 = scmp.ne.s32.totalorder %s124, %s127
    %p136 = scmp.eq.s32.totalorder %s16, 1
    %p137 = por %p135, %p136
    %p138 = scmp.ne.s32.totalorder %s127, %s128
    %p139 = scmp.eq.s32.totalorder %s16, 0
    %p140 = por %p138, %p139
    %p141 = scmp.ne.s32.totalorder %s127, %s128
    %p142 = scmp.eq.s32.totalorder %s17, 1
    %p143 = por %p141, %p142
    %p145 = scmp.ne.s32.totalorder %s128, %s144
    %p146 = scmp.eq.s32.totalorder %s17, 0
    %p147 = por %p145, %p146
    %s148 = ssub.s32 %s18, %s37
    %s149 = ssub.s32 %s19, %s33
    %s150 = sor.u32 %s148, %s149
    %s151 = ssub.s32 %s20, %s29
    %s152 = sor.u32 %s150, %s151
    %p153 = scmp.eq.s32.totalorder %s152, 0
    %s155 = sadd.s32 %s154, 1
    %s156 = scalar_select %p153, %s154, %s155
    %p159 = pneg %p153
    %p160 = scmp.eq.s32.totalorder %s11, 1
    %p161 = por %p159, %p160
    %p162 = scmp.ne.s32.totalorder %s154, %s157
    %p163 = scmp.eq.s32.totalorder %s11, 0
    %p164 = por %p162, %p163
    %p165 = scmp.ne.s32.totalorder %s154, %s157
    %p166 = scmp.eq.s32.totalorder %s16, 1
    %p167 = por %p165, %p166
    %p168 = scmp.ne.s32.totalorder %s157, %s158
    %p169 = scmp.eq.s32.totalorder %s16, 0
    %p170 = por %p168, %p169
    %p171 = scmp.ne.s32.totalorder %s157, %s158
    %p172 = scmp.eq.s32.totalorder %s17, 1
    %p173 = por %p171, %p172
    %p175 = scmp.ne.s32.totalorder %s158, %s174
    %p176 = scmp.eq.s32.totalorder %s17, 0
    %p177 = por %p175, %p176
    %s178 = ssub.s32 %s18, %s37
    %s179 = ssub.s32 %s19, %s33
    %s180 = sor.u32 %s178, %s179
    %s181 = ssub.s32 %s20, %s29
    %s182 = sor.u32 %s180, %s181
    %p183 = scmp.eq.s32.totalorder %s182, 0
    %s185 = sadd.s32 %s184, 1
    %s186 = scalar_select %p183, %s184, %s185
    %p189 = pneg %p183
    %p190 = scmp.eq.s32.totalorder %s11, 1
    %p191 = por %p189, %p190
    %p192 = scmp.ne.s32.totalorder %s184, %s187
    %p193 = scmp.eq.s32.totalorder %s11, 0
    %p194 = por %p192, %p193
    %p195 = scmp.ne.s32.totalorder %s184, %s187
    %p196 = scmp.eq.s32.totalorder %s16, 1
    %p197 = por %p195, %p196
    %p198 = scmp.ne.s32.totalorder %s187, %s188
    %p199 = scmp.eq.s32.totalorder %s16, 0
    %p200 = por %p198, %p199
    %p201 = scmp.ne.s32.totalorder %s187, %s188
    %p202 = scmp.eq.s32.totalorder %s17, 1
    %p203 = por %p201, %p202
    %p205 = scmp.ne.s32.totalorder %s188, %s204
    %p206 = scmp.eq.s32.totalorder %s17, 0
    %p207 = por %p205, %p206
    %p208 = scmp.le.s32.totalorder 1, %s11
    %p209 = scmp.lt.s32.totalorder %s11, 3
    %p210 = pnand %p208, %p209
    %p211 = pneg %p210
    // Predicated region
    $region9: #{_lambda_.5} parent=5 // pred_check
      _
    $region10: #{_lambda_.5} parent=5 // pred_check_branch
      %213 = sbr.rel (%p210) target = $region12
    $region11: #{_lambda_.5} parent=5 // pred_region
      %s214 = ssub.s32 %s11, 1
      // Predicated region
      $region13: #{_lambda_.5} parent=11 // pred_check
        %p215 = pneg %p140
      $region14: #{_lambda_.5} parent=11 // pred_check_branch
        %217 = sbr.rel (%p215) target = $region16
      $region15: #{_lambda_.5} parent=11 // pred_region
        %p218 = scmp.lt.s32.totalorder %s23, 0
        %s219 = scalar_select %p218, %s23, 0
        %s220 = scalar_lea.vmem %s3, %s219
      $region16: #{_lambda_.5} parent=11 // pred_fallthru
        _
    $region12: #{_lambda_.5} parent=5 // pred_fallthru
      _
    %p221 = scmp.lt.s32.totalorder %s11, 2
    // Predicated region
    $region17: #{_lambda_.5} parent=5 // pred_check
      %p222 = pneg %p221
    $region18: #{_lambda_.5} parent=5 // pred_check_branch
      %224 = sbr.rel (%p222) target = $region20
    $region19: #{_lambda_.5} parent=5 // pred_region
      // Predicated region
      $region21: #{_lambda_.5} parent=19 // pred_check
        %p225 = pneg %p52
      $region22: #{_lambda_.5} parent=19 // pred_check_branch
        %227 = sbr.rel (%p225) target = $region24
      $region23: #{_lambda_.5} parent=19 // pred_region
        %s228 = smul.u32 8, %s19
        %p229 = scmp.lt.s32.totalorder %s18, 1
        %s230 = scalar_select %p229, %s18, 1
        %p231 = scmp.lt.s32.totalorder %s228, 7
        %s232 = scalar_select %p231, %s228, 7
        %s233 = smul.addr %s230, 8
        %s234 = sadd.s32 %s232, %s233
        %s235 = smul.addr %s234, 4
        %s236 = scalar_lea.vmem %s0, %s235
        %s237 = smul.u32 8, %s19
      $region24: #{_lambda_.5} parent=19 // pred_fallthru
        _
      // Predicated region
      $region25: #{_lambda_.5} parent=19 // pred_check
        %p238 = pneg %p80
      $region26: #{_lambda_.5} parent=19 // pred_check_branch
        %240 = sbr.rel (%p238) target = $region28
      $region27: #{_lambda_.5} parent=19 // pred_region
        %p241 = scmp.lt.s32.totalorder %s18, 1
        %s242 = scalar_select %p241, %s18, 1
        %p243 = scmp.lt.s32.totalorder %s20, 0
        %s244 = scalar_select %p243, %s20, 0
        %s245 = smul.addr %s242, 16
        %s246 = sadd.s32 %s244, %s245
        %s247 = smul.addr %s246, 4
        %s248 = scalar_lea.vmem %s1, %s247
      $region28: #{_lambda_.5} parent=19 // pred_fallthru
        _
      // Predicated region
      $region29: #{_lambda_.5} parent=19 // pred_check
        %p249 = pneg %p108
      $region30: #{_lambda_.5} parent=19 // pred_check_branch
        %251 = sbr.rel (%p249) target = $region32
      $region31: #{_lambda_.5} parent=19 // pred_region
        %p252 = scmp.lt.s32.totalorder %s18, 1
        %s253 = scalar_select %p252, %s18, 1
        %p254 = scmp.lt.s32.totalorder %s20, 0
        %s255 = scalar_select %p254, %s20, 0
        %s256 = sadd.s32 %s255, %s253
        %s257 = scalar_lea.vmem %s2, %s256
      $region32: #{_lambda_.5} parent=19 // pred_fallthru
        _
      // Predicated region
      $region33: #{_lambda_.5} parent=19 // pred_check
        %p258 = pneg %p164
      $region34: #{_lambda_.5} parent=19 // pred_check_branch
        %260 = sbr.rel (%p258) target = $region36
      $region35: #{_lambda_.5} parent=19 // pred_region
        %s261 = smul.u32 8, %s19
        %p262 = scmp.lt.s32.totalorder %s18, 1
        %s263 = scalar_select %p262, %s18, 1
        %p264 = scmp.lt.s32.totalorder %s261, 7
        %s265 = scalar_select %p264, %s261, 7
        %p266 = scmp.lt.s32.totalorder %s20, 0
        %s267 = scalar_select %p266, %s20, 0
        %s268 = sadd.s32 %s267, %s265
        %s269 = smul.addr %s263, 8
        %s270 = sadd.s32 %s268, %s269
        %s271 = smul.addr %s270, 8
        %s272 = scalar_lea.vmem %s4, %s271
        %s273 = smul.u32 8, %s19
      $region36: #{_lambda_.5} parent=19 // pred_fallthru
        _
    $region20: #{_lambda_.5} parent=5 // pred_fallthru
      _
    %p274 = scmp.le.s32.totalorder 1, %s11
    %p275 = scmp.lt.s32.totalorder %s11, 3
    %p276 = pnand %p274, %p275
    %p277 = pneg %p276
    // Predicated region
    $region37: #{_lambda_.5} parent=5 // pred_check
      _
    $region38: #{_lambda_.5} parent=5 // pred_check_branch
      %279 = sbr.rel (%p276) target = $region40
    $region39: #{_lambda_.5} parent=5 // pred_region
      %s280 = ssub.s32 %s11, 1
      %s281 = smul.u32 8, %s22
      %p282 = scmp.lt.s32.totalorder %s21, 1
      %s283 = scalar_select %p282, %s21, 1
      %p284 = scmp.lt.s32.totalorder %s281, 7
      %s285 = scalar_select %p284, %s281, 7
      %s286 = smul.addr %s283, 8
      %s287 = sadd.s32 %s285, %s286
      %s288 = smul.addr %s287, 4
      %s289 = scalar_lea.vmem %s0, %s288
      %p290 = pneg %p58
      %p291 = pneg %p55
      %p292 = scmp.lt.s32.totalorder %s21, 1
      %s293 = scalar_select %p292, %s21, 1
      %p294 = scmp.lt.s32.totalorder %s23, 0
      %s295 = scalar_select %p294, %s23, 0
      %s296 = smul.addr %s293, 16
      %s297 = sadd.s32 %s295, %s296
      %s298 = smul.addr %s297, 4
      %s299 = scalar_lea.vmem %s1, %s298
      %p300 = pneg %p86
      %p301 = pneg %p83
      %p302 = scmp.lt.s32.totalorder %s21, 1
      %s303 = scalar_select %p302, %s21, 1
      %p304 = scmp.lt.s32.totalorder %s23, 0
      %s305 = scalar_select %p304, %s23, 0
      %s306 = sadd.s32 %s305, %s303
      %s307 = scalar_lea.vmem %s2, %s306
      %p308 = pneg %p114
      %p309 = pneg %p111
      %p310 = scmp.lt.s32.totalorder %s23, 0
      %s311 = scalar_select %p310, %s23, 0
      %s312 = scalar_lea.vmem %s3, %s311
      %p313 = pneg %p140
      %p314 = pneg %p137
      %s315 = smul.u32 8, %s22
      %p316 = scmp.lt.s32.totalorder %s21, 1
      %s317 = scalar_select %p316, %s21, 1
      %p318 = scmp.lt.s32.totalorder %s315, 7
      %s319 = scalar_select %p318, %s315, 7
      %p320 = scmp.lt.s32.totalorder %s23, 0
      %s321 = scalar_select %p320, %s23, 0
      %s322 = sadd.s32 %s321, %s319
      %s323 = smul.addr %s317, 8
      %s324 = sadd.s32 %s322, %s323
      %s325 = smul.addr %s324, 8
      %s326 = scalar_lea.vmem %s4, %s325
      %p327 = pneg %p170
      %p328 = pneg %p167
      %p329 = pneg %p200
      %p330 = pneg %p197
      %s331 = smul.u32 8, %s22
      %p332 = scmp.lt.s32.totalorder %s21, 1
      %s333 = scalar_select %p332, %s21, 1
      %p334 = scmp.lt.s32.totalorder %s331, 7
      %s335 = scalar_select %p334, %s331, 7
      %p336 = scmp.lt.s32.totalorder %s23, 0
      %s337 = scalar_select %p336, %s23, 0
      %s338 = sadd.s32 %s337, %s335
      %s339 = smul.addr %s333, 8
      %s340 = sadd.s32 %s338, %s339
      %s341 = smul.addr %s340, 8
      %s342 = scalar_lea.vmem %s5, %s341
      %s343 = smul.u32 8, %s22
      %p344 = scmp.lt.s32.totalorder %s21, 1
      %s345 = scalar_select %p344, %s21, 1
      %p346 = scmp.lt.s32.totalorder %s343, 7
      %s347 = scalar_select %p346, %s343, 7
      %s348 = smul.addr %s345, 8
      %s349 = sadd.s32 %s347, %s348
      %s350 = smul.addr %s349, 4
      %s351 = scalar_lea.vmem %s0, %s350
      %s352 = smul.u32 8, %s22
      %p353 = scmp.lt.s32.totalorder %s21, 1
      %s354 = scalar_select %p353, %s21, 1
      %p355 = scmp.lt.s32.totalorder %s23, 0
      %s356 = scalar_select %p355, %s23, 0
      %s357 = smul.addr %s354, 16
      %s358 = sadd.s32 %s356, %s357
      %s359 = smul.addr %s358, 4
      %s360 = scalar_lea.vmem %s1, %s359
      %p361 = scmp.lt.s32.totalorder %s21, 1
      %s362 = scalar_select %p361, %s21, 1
      %p363 = scmp.lt.s32.totalorder %s23, 0
      %s364 = scalar_select %p363, %s23, 0
      %s365 = sadd.s32 %s364, %s362
      %s366 = scalar_lea.vmem %s2, %s365
      %p367 = scmp.lt.s32.totalorder %s23, 0
      %s368 = scalar_select %p367, %s23, 0
      %s369 = scalar_lea.vmem %s3, %s368
      %s370 = smul.u32 8, %s22
      %p371 = scmp.lt.s32.totalorder %s21, 1
      %s372 = scalar_select %p371, %s21, 1
      %p373 = scmp.lt.s32.totalorder %s370, 7
      %s374 = scalar_select %p373, %s370, 7
      %p375 = scmp.lt.s32.totalorder %s23, 0
      %s376 = scalar_select %p375, %s23, 0
      %s377 = sadd.s32 %s376, %s374
      %s378 = smul.addr %s372, 8
      %s379 = sadd.s32 %s377, %s378
      %s380 = smul.addr %s379, 8
      %s381 = scalar_lea.vmem %s4, %s380
      %s382 = smul.u32 8, %s22
      %s383 = smul.u32 8, %s22
      %p384 = scmp.lt.s32.totalorder %s21, 1
      %s385 = scalar_select %p384, %s21, 1
      %p386 = scmp.lt.s32.totalorder %s383, 7
      %s387 = scalar_select %p386, %s383, 7
      %p388 = scmp.lt.s32.totalorder %s23, 0
      %s389 = scalar_select %p388, %s23, 0
      %s390 = sadd.s32 %s389, %s387
      %s391 = smul.addr %s385, 8
      %s392 = sadd.s32 %s390, %s391
      %s393 = smul.addr %s392, 8
      %s394 = scalar_lea.vmem %s5, %s393
      %s395 = smul.u32 8, %s22
      %v397 = vld [vmem:[%s351] sm:$0xf]
      %v398 = vld [vmem:[%s351 + $0x4] sm:$0xf]
      %v399 = vld [vmem:[%s351 + $0x8] sm:$0xf]
      %v400 = vld [vmem:[%s351 + $0xc] sm:$0xf]
      %v401 = vld [vmem:[%s351 + $0x10] sm:$0xf]
      %v402 = vld [vmem:[%s351 + $0x14] sm:$0xf]
      %v403 = vld [vmem:[%s351 + $0x18] sm:$0xf]
      %v404 = vld [vmem:[%s351 + $0x1c] sm:$0xf]
      %v405 = vld [vmem:[%s360] sm:$0xf]
      %v406 = vld [vmem:[%s360 + $0x4] sm:$0xf]
      %v407 = vld [vmem:[%s360 + $0x8] sm:$0xf]
      %v408 = vld [vmem:[%s360 + $0xc] sm:$0xf]
      %v409 = vld [vmem:[%s360 + $0x10] sm:$0xf]
      %v410 = vld [vmem:[%s360 + $0x14] sm:$0xf]
      %v411 = vld [vmem:[%s360 + $0x18] sm:$0xf]
      %v412 = vld [vmem:[%s360 + $0x1c] sm:$0xf]
      %v413 = vld [vmem:[%s360 + $0x20] sm:$0xf]
      %v414 = vld [vmem:[%s360 + $0x24] sm:$0xf]
      %v415 = vld [vmem:[%s360 + $0x28] sm:$0xf]
      %v416 = vld [vmem:[%s360 + $0x2c] sm:$0xf]
      %v417 = vld [vmem:[%s360 + $0x30] sm:$0xf]
      %v418 = vld [vmem:[%s360 + $0x34] sm:$0xf]
      %v419 = vld [vmem:[%s360 + $0x38] sm:$0xf]
      %v420 = vld [vmem:[%s360 + $0x3c] sm:$0xf]
      %v429 = vunpack.c.l.b16 %v397
      %v430 = vunpack.c.l.b16 %v398
      %v431 = vunpack.c.l.b16 %v399
      %v432 = vunpack.c.l.b16 %v400
      %v433 = vunpack.c.l.b16 %v401
      %v434 = vunpack.c.l.b16 %v402
      %v435 = vunpack.c.l.b16 %v403
      %v436 = vunpack.c.l.b16 %v404
      %v437 = vpack.c.b16 %v430, %v429
      %v438 = vpack.c.b16 %v432, %v431
      %v439 = vpack.c.b16 %v434, %v433
      %v440 = vpack.c.b16 %v436, %v435
      %v461 = vunpack.c.l.b16 %v405
      %v462 = vunpack.c.l.b16 %v406
      %v463 = vunpack.c.l.b16 %v407
      %v464 = vunpack.c.l.b16 %v408
      %v465 = vunpack.c.l.b16 %v409
      %v466 = vunpack.c.l.b16 %v410
      %v467 = vunpack.c.l.b16 %v411
      %v468 = vunpack.c.l.b16 %v412
      %v469 = vunpack.c.l.b16 %v413
      %v470 = vunpack.c.l.b16 %v414
      %v471 = vunpack.c.l.b16 %v415
      %v472 = vunpack.c.l.b16 %v416
      %v473 = vunpack.c.l.b16 %v417
      %v474 = vunpack.c.l.b16 %v418
      %v475 = vunpack.c.l.b16 %v419
      %v476 = vunpack.c.l.b16 %v420
      %v477 = vpack.c.b16 %v462, %v461
      %v478 = vpack.c.b16 %v464, %v463
      %v479 = vpack.c.b16 %v466, %v465
      %v480 = vpack.c.b16 %v468, %v467
      %v481 = vpack.c.b16 %v470, %v469
      %v482 = vpack.c.b16 %v472, %v471
      %v483 = vpack.c.b16 %v474, %v473
      %v484 = vpack.c.b16 %v476, %v475
      %493 = vmatprep.subr.bf16.mxu0 0
      %494 = vmatpush1.bf16.msra.mxu0 %v484
      %495 = vmatprep.subr.bf16.mxu0 0
      %496 = vmatpush1.bf16.msra.mxu0 %v483
      %497 = vmatprep.subr.bf16.mxu0 0
      %498 = vmatpush1.bf16.msra.mxu0 %v482
      %499 = vmatprep.subr.bf16.mxu0 0
      %500 = vmatpush1.bf16.msra.mxu0 %v481
      %501 = vmatprep.subr.bf16.mxu0 0
      %502 = vmatpush1.bf16.msra.mxu0 %v480
      %503 = vmatprep.subr.bf16.mxu0 0
      %504 = vmatpush1.bf16.msra.mxu0 %v479
      %505 = vmatprep.subr.bf16.mxu0 0
      %506 = vmatpush1.bf16.msra.mxu0 %v478
      %507 = vmatprep.subr.bf16.mxu0 0
      %508 = vmatpush1.bf16.msra.mxu0 %v477
      %509 = vmatprep.subr.bf16.mxu0 0
      %510 = vmatpush2.bf16.msra.mxu0 0
      %511 = vmatprep.subr.bf16.mxu0 0
      %512 = vmatpush2.bf16.msra.mxu0 0
      %513 = vmatprep.subr.bf16.mxu0 0
      %514 = vmatpush2.bf16.msra.mxu0 0
      %515 = vmatprep.subr.bf16.mxu0 0
      %516 = vmatpush2.bf16.msra.mxu0 0
      %517 = vmatprep.subr.bf16.mxu0 0
      %518 = vmatpush2.bf16.msra.mxu0 0
      %519 = vmatprep.subr.bf16.mxu0 0
      %520 = vmatpush2.bf16.msra.mxu0 0
      %521 = vmatprep.subr.bf16.mxu0 0
      %522 = vmatpush2.bf16.msra.mxu0 0
      %523 = vmatprep.subr.bf16.mxu0 0
      %524 = vmatpush2.bf16.msra.mxu0 0
      %525 = vmatprep.mubr.bf16.mxu0 0
      %526 = vmatmul.mubr.bf16.gmra.mxu0 %v437
      %v527 = vpop.f32.mrf.mxu0
      %v528 = vadd.f32 0.0, %v527
      %v529 = vpop.f32.mrf.mxu0
      %v530 = vpop.f32.mrf.mxu0
      %v531 = vadd.f32 0.0, %v530
      %v532 = vpop.f32.mrf.mxu0
      %533 = vmatprep.mubr.bf16.mxu0 0
      %534 = vmatmul.mubr.bf16.gmra.mxu0 %v438
      %v535 = vpop.f32.mrf.mxu0
      %v536 = vadd.f32 0.0, %v535
      %v537 = vpop.f32.mrf.mxu0
      %v538 = vpop.f32.mrf.mxu0
      %v539 = vadd.f32 0.0, %v538
      %v540 = vpop.f32.mrf.mxu0
      %541 = vmatprep.mubr.bf16.mxu0 0
      %542 = vmatmul.mubr.bf16.gmra.mxu0 %v439
      %v543 = vpop.f32.mrf.mxu0
      %v544 = vadd.f32 0.0, %v543
      %v545 = vpop.f32.mrf.mxu0
      %v546 = vpop.f32.mrf.mxu0
      %v547 = vadd.f32 0.0, %v546
      %v548 = vpop.f32.mrf.mxu0
      %549 = vmatprep.mubr.bf16.mxu0 0
      %550 = vmatmul.mubr.bf16.gmra.mxu0 %v440
      %v551 = vpop.f32.mrf.mxu0
      %v552 = vadd.f32 0.0, %v551
      %v553 = vpop.f32.mrf.mxu0
      %v554 = vpop.f32.mrf.mxu0
      %v555 = vadd.f32 0.0, %v554
      %v556 = vpop.f32.mrf.mxu0
      %557 = vdwg.mxu0
      %v558 = vld [vmem:[%s366] sm:$0x1]
      %v560 = vlaneseq
      %v561 = vshrl.u32 %v560, 7
      %v562 = vsub.s32 0, %v561
      %v563 = vrot.slane %v558, %v562
      %v565 = vmul.f32 %v528, %v563
      %v566 = vmul.f32 %v531, %v563
      %v567 = vmul.f32 %v536, %v563
      %v568 = vmul.f32 %v539, %v563
      %v569 = vmul.f32 %v544, %v563
      %v570 = vmul.f32 %v547, %v563
      %v571 = vmul.f32 %v552, %v563
      %v572 = vmul.f32 %v555, %v563
      %v573 = vld [vmem:[%s369] sm:$0x1]
      %v575 = vlaneseq
      %v576 = vshrl.u32 %v575, 7
      %v577 = vsub.s32 0, %v576
      %v578 = vrot.slane %v573, %v577
      %v580 = vadd.f32 %v565, %v578
      %v581 = vadd.f32 %v566, %v578
      %v582 = vadd.f32 %v567, %v578
      %v583 = vadd.f32 %v568, %v578
      %v584 = vadd.f32 %v569, %v578
      %v585 = vadd.f32 %v570, %v578
      %v586 = vadd.f32 %v571, %v578
      %v587 = vadd.f32 %v572, %v578
      %v588 = vld [vmem:[%s381] sm:$0xff]
      %v589 = vld [vmem:[%s381 + $0x8] sm:$0xff]
      %v590 = vld [vmem:[%s381 + $0x10] sm:$0xff]
      %v591 = vld [vmem:[%s381 + $0x18] sm:$0xff]
      %v592 = vld [vmem:[%s381 + $0x20] sm:$0xff]
      %v593 = vld [vmem:[%s381 + $0x28] sm:$0xff]
      %v594 = vld [vmem:[%s381 + $0x30] sm:$0xff]
      %v595 = vld [vmem:[%s381 + $0x38] sm:$0xff]
      %v596 = vadd.f32 %v580, %v588
      %v597 = vadd.f32 %v581, %v589
      %v598 = vadd.f32 %v582, %v590
      %v599 = vadd.f32 %v583, %v591
      %v600 = vadd.f32 %v584, %v592
      %v601 = vadd.f32 %v585, %v593
      %v602 = vadd.f32 %v586, %v594
      %v603 = vadd.f32 %v587, %v595
      %v604 = vmax.f32 %v596, 0.0
      %v605 = vmax.f32 %v597, 0.0
      %v606 = vmax.f32 %v598, 0.0
      %v607 = vmax.f32 %v599, 0.0
      %v608 = vmax.f32 %v600, 0.0
      %v609 = vmax.f32 %v601, 0.0
      %v610 = vmax.f32 %v602, 0.0
      %v611 = vmax.f32 %v603, 0.0
      %612 = vst [vmem:[%s394] sm:$0xff] %v604
      %613 = vst [vmem:[%s394 + $0x8] sm:$0xff] %v605
      %614 = vst [vmem:[%s394 + $0x10] sm:$0xff] %v606
      %615 = vst [vmem:[%s394 + $0x18] sm:$0xff] %v607
      %616 = vst [vmem:[%s394 + $0x20] sm:$0xff] %v608
      %617 = vst [vmem:[%s394 + $0x28] sm:$0xff] %v609
      %618 = vst [vmem:[%s394 + $0x30] sm:$0xff] %v610
      %619 = vst [vmem:[%s394 + $0x38] sm:$0xff] %v611
      %s620 = smul.u32 8, %s22
      %p621 = scmp.lt.s32.totalorder %s21, 1
      %s622 = scalar_select %p621, %s21, 1
      %p623 = scmp.lt.s32.totalorder %s620, 7
      %s624 = scalar_select %p623, %s620, 7
      %p625 = scmp.lt.s32.totalorder %s23, 0
      %s626 = scalar_select %p625, %s23, 0
      %s627 = sadd.s32 %s626, %s624
      %s628 = smul.addr %s622, 8
      %s629 = sadd.s32 %s627, %s628
      %s630 = smul.addr %s629, 8
      %s631 = scalar_lea.vmem %s5, %s630
      // Predicated region
      $region41: #{_lambda_.5} parent=39 // pred_check
        %p632 = pneg %p197
      $region42: #{_lambda_.5} parent=39 // pred_check_branch
        %634 = sbr.rel (%p632) target = $region44
      $region43: #{_lambda_.5} parent=39 // pred_region
        %s635 = smul.u32 8, %s22
      $region44: #{_lambda_.5} parent=39 // pred_fallthru
        _
    $region40: #{_lambda_.5} parent=5 // pred_fallthru
      _
    %p636 = scmp.le.s32.totalorder 2, %s11
    // Predicated region
    $region45: #{_lambda_.5} parent=5 // pred_check
      %p637 = pneg %p636
    $region46: #{_lambda_.5} parent=5 // pred_check_branch
      %639 = sbr.rel (%p637) target = $region48
    $region47: #{_lambda_.5} parent=5 // pred_region
      %s640 = ssub.s32 %s11, 2
      // Predicated region
      $region49: #{_lambda_.5} parent=47 // pred_check
        %p641 = pneg %p203
      $region50: #{_lambda_.5} parent=47 // pred_check_branch
        %643 = sbr.rel (%p641) target = $region52
      $region51: #{_lambda_.5} parent=47 // pred_region
        %s644 = smul.u32 8, %s25
        %p645 = scmp.lt.s32.totalorder %s24, 1
        %s646 = scalar_select %p645, %s24, 1
        %p647 = scmp.lt.s32.totalorder %s644, 7
        %s648 = scalar_select %p647, %s644, 7
        %p649 = scmp.lt.s32.totalorder %s26, 0
        %s650 = scalar_select %p649, %s26, 0
        %s651 = sadd.s32 %s650, %s648
        %s652 = smul.addr %s646, 8
        %s653 = sadd.s32 %s651, %s652
        %s654 = smul.addr %s653, 8
        %s655 = scalar_lea.vmem %s5, %s654
      $region52: #{_lambda_.5} parent=47 // pred_fallthru
        _
    $region48: #{_lambda_.5} parent=5 // pred_fallthru
      _
  $region6: #{_lambda_.5} parent=0 // loop_footer
    %s15 = sadd.s32 1, %s11
  $region7: #{_lambda_.5} parent=0 // loop_footer_branch
    %10 = sbr.rel target = $region3
  $region8: #{_lambda_.5} parent=0 // loop_exit
    _

</llo_original>
